<compile_context>
chip_gen: v6e
topology: v6e:2x2x1
jax: 0.10.0
libtpu: 0.0.40
codegen_flags: <defaults>
</compile_context>

<pallas_src>
import functools

import jax
import jax.numpy as jnp
from jax.experimental import pallas as pl
from jax.experimental.pallas import tpu as pltpu


def _round_up(x, m):
    return (x + m - 1) // m * m


# --------------------------------------------------------------------------
# Matmul kernel with fused BatchNorm-statistics epilogue.
#   C      = A @ B                (bf16 x bf16 -> f32 MXU acc -> bf16 store)
#   colsum = sum_rows(C)          (f32)
#   colssq = sum_rows(C * C)      (f32)
# Grid is (j, i, k) = (N tiles, M tiles, K tiles); j is OUTERMOST so the
# (1, bn) statistics blocks stay resident in VMEM across the whole i sweep
# (accumulated over the "arbitrary" i axis) and are flushed exactly once,
# when j changes.
# --------------------------------------------------------------------------
def _mm_stats_kernel(a_ref, b_ref, o_ref, sum_ref, ssq_ref, acc_ref,
                     *, bm, m_total, need_mask):
    i = pl.program_id(1)
    k = pl.program_id(2)

    @pl.when(k == 0)
    def _():
        acc_ref[...] = jnp.zeros_like(acc_ref)

    @pl.when((i == 0) & (k == 0))
    def _():
        sum_ref[...] = jnp.zeros_like(sum_ref)
        ssq_ref[...] = jnp.zeros_like(ssq_ref)

    acc_ref[...] += jnp.dot(a_ref[...], b_ref[...],
                            preferred_element_type=jnp.float32)

    @pl.when(k == pl.num_programs(2) - 1)
    def _():
        acc = acc_ref[...]
        o_ref[...] = acc.astype(o_ref.dtype)
        if need_mask:  # zero contribution of OOB rows in the last partial row tile
            row = jax.lax.broadcasted_iota(jnp.int32, acc.shape, 0) + i * bm
            acc = jnp.where(row < m_total, acc, 0.0)
        # Stats from the f32 accumulator (E[x^2] - mean^2 later, in f32).
        sum_ref[...] += jnp.sum(acc, axis=0, keepdims=True)
        ssq_ref[...] += jnp.sum(acc * acc, axis=0, keepdims=True)


def _pick_k_tile(K):
    """K tile <= 1152 (v5e/v7x VMEM budget) that divides K, else pad K."""
    if K <= 1152:
        return K, K
    for c in (1152, 1024, 896, 768, 640, 512, 384, 256, 128):
        if K % c == 0:
            return c, K
    return 512, _round_up(K, 512)   # rare fallback: never taken for resnet18


def pallas_matmul_stats(a, b, out_dtype=jnp.bfloat16):
    """Returns (A @ B, per-column sum, per-column sum of squares)."""
    M, K = a.shape
    K2, N = b.shape
    assert K == K2
    a = a.astype(jnp.bfloat16)
    b = b.astype(jnp.bfloat16)

    bm = M if M <= 512 else 512
    bn = N if N <= 256 else 256
    bk, Kp = _pick_k_tile(K)
    if Kp != K:
        a = jnp.pad(a, ((0, 0), (0, Kp - K)))
        b = jnp.pad(b, ((0, Kp - K), (0, 0)))
    nk = Kp // bk
    grid = (pl.cdiv(N, bn), pl.cdiv(M, bm), nk)      # (j, i, k); j outermost

    kern = functools.partial(_mm_stats_kernel, bm=bm, m_total=M,
                             need_mask=(M % bm != 0))
    return pl.pallas_call(
        kern,
        out_shape=(jax.ShapeDtypeStruct((M, N), out_dtype),
                   jax.ShapeDtypeStruct((1, N), jnp.float32),
                   jax.ShapeDtypeStruct((1, N), jnp.float32)),
        grid_spec=pltpu.PrefetchScalarGridSpec(
            num_scalar_prefetch=0,
            grid=grid,
            in_specs=[pl.BlockSpec((bm, bk), lambda j, i, k: (i, k)),
                      pl.BlockSpec((bk, bn), lambda j, i, k: (k, j))],
            out_specs=(pl.BlockSpec((bm, bn), lambda j, i, k: (i, j)),
                       pl.BlockSpec((1, bn), lambda j, i, k: (0, j)),
                       pl.BlockSpec((1, bn), lambda j, i, k: (0, j))),
            scratch_shapes=[pltpu.VMEM((bm, bn), jnp.float32)]),
        compiler_params=pltpu.CompilerParams(
            # i accumulates the statistics -> "arbitrary"; j stays "parallel"
            # so v7x can split the N tiles across its two TensorCores.
            dimension_semantics=("parallel", "arbitrary", "arbitrary"),
            vmem_limit_bytes=32 * 1024 * 1024),
    )(a, b)


# --------------------------------------------------------------------------
# BatchNorm finalize (tiny one-shot kernel) + tiled apply kernels.
# --------------------------------------------------------------------------
def _bn_finalize_kernel(sum_ref, ssq_ref, g_ref, b_ref, scale_ref, shift_ref,
                        *, inv_count, eps):
    mean = sum_ref[...] * inv_count
    var = jnp.maximum(ssq_ref[...] * inv_count - mean * mean, 0.0)
    scale = g_ref[...] * jax.lax.rsqrt(var + eps)
    scale_ref[...] = scale
    shift_ref[...] = b_ref[...] - mean * scale


def bn_scale_shift(colsum, colssq, gamma, beta, count, eps=1e-5):
    C = colsum.shape[1]
    g = gamma.reshape(1, C).astype(jnp.float32)
    b = beta.reshape(1, C).astype(jnp.float32)
    kern = functools.partial(_bn_finalize_kernel, inv_count=1.0 / count, eps=eps)
    return pl.pallas_call(
        kern,
        out_shape=(jax.ShapeDtypeStruct((1, C), jnp.float32),
                   jax.ShapeDtypeStruct((1, C), jnp.float32)),
    )(colsum, colssq, g, b)


def _bn_apply_kernel(x_ref, scale_ref, shift_ref, o_ref, *, relu):
    y = x_ref[...].astype(jnp.float32) * scale_ref[...] + shift_ref[...]
    if relu:
        y = jnp.maximum(y, 0.0)
    o_ref[...] = y.astype(o_ref.dtype)


def _bn_apply_res_kernel(x_ref, r_ref, scale_ref, shift_ref, o_ref):
    # BasicBlock epilogue: BN apply + residual add + ReLU, fused.
    y = x_ref[...].astype(jnp.float32) * scale_ref[...] + shift_ref[...]
    y = y + r_ref[...].astype(jnp.float32)
    o_ref[...] = jnp.maximum(y, 0.0).astype(o_ref.dtype)


def _row_tile(M, C):
    if M <= 1024:
        return M
    t = max(512, min(4096, (1 << 20) // (2 * C)))   # ~1 MiB bf16 per input tile
    return min(M, (t // 8) * 8)


def bn_apply(x2d, scale, shift, relu=False, residual=None,
             out_dtype=jnp.bfloat16):
    """y = x*scale + shift (+residual)(+ReLU); bf16 in/out, f32 math inside."""
    M, C = x2d.shape
    bm = _row_tile(M, C)
    grid = (pl.cdiv(M, bm),)
    row_spec = pl.BlockSpec((bm, C), lambda i: (i, 0))
    vec_spec = pl.BlockSpec((1, C), lambda i: (0, 0))
    cparams = pltpu.CompilerParams(dimension_semantics=("parallel",),
                                   vmem_limit_bytes=32 * 1024 * 1024)
    # TODO(synk): for C=64 layers a lane-dense (M/2, 128) view would avoid
    # masked vst.msk stores, but it needs the *producer* (matmul) to emit the
    # folded layout; a glue-side reshape would relayout the slab and cancel
    # the saving.
    if residual is None:
        kern = functools.partial(_bn_apply_kernel, relu=relu)
        in_specs = [row_spec, vec_spec, vec_spec]
        args = (x2d, scale, shift)
    else:
        kern = _bn_apply_res_kernel
        in_specs = [row_spec, row_spec, vec_spec, vec_spec]
        args = (x2d, residual, scale, shift)
    return pl.pallas_call(
        kern,
        out_shape=jax.ShapeDtypeStruct((M, C), out_dtype),
        grid=grid,
        in_specs=in_specs,
        out_specs=row_spec,
        compiler_params=cparams,
    )(*args)


# --------------------------------------------------------------------------
# Conv / ResNet-18 glue (patch extraction, reshapes) — compute stays in Pallas
# --------------------------------------------------------------------------
def conv2d(x_nhwc, wp, stride, pad):
    """Conv as (bf16 im2col patches) x (pre-transposed bf16 weights), with the
    per-channel BN statistics fused into the matmul.  Returns (y, sum, ssq)."""
    N, H, W, Cin = x_nhwc.shape
    KH, KW = wp['kh'], wp['kw']
    w_mat = wp['w']                       # (Kpad, O) bf16, prepared once
    O = w_mat.shape[1]
    xb = x_nhwc.astype(jnp.bfloat16)      # bf16 before im2col -> half the bytes
    if pad > 0:
        xb = jnp.pad(xb, ((0, 0), (pad, pad), (pad, pad), (0, 0)))
    OH = (H + 2 * pad - KH) // stride + 1
    OW = (W + 2 * pad - KW) // stride + 1
    M = N * OH * OW
    if KH == 1 and KW == 1:
        patches = xb[:, ::stride, ::stride, :].reshape(M, Cin)
    else:
        # TODO(synk): replace im2col with an implicit-GEMM direct conv
        # (shifted-window A-tile reads via manual DMA / element-offset block
        # specs); im2col still inflates activation HBM reads KH*KW-fold and
        # materializes the patch slab once in HBM.
        cols = [xb[:, i:i + stride * OH:stride, j:j + stride * OW:stride, :]
                for i in range(KH) for j in range(KW)]
        k_pad = w_mat.shape[0] - KH * KW * Cin
        if k_pad > 0:   # stem conv: K=147 lane-padded to 256 inside the concat
            cols.append(jnp.zeros((N, OH, OW, k_pad), jnp.bfloat16))
        patches = jnp.concatenate(cols, axis=-1).reshape(M, w_mat.shape[0])
    y2d, s, q = pallas_matmul_stats(patches, w_mat)
    return y2d.reshape(N, OH, OW, O), s, q


def conv_bn(x_nhwc, wp, stride, pad, gamma, beta, relu=True, residual=None,
            out_dtype=jnp.bfloat16):
    y, s, q = conv2d(x_nhwc, wp, stride, pad)
    N, OH, OW, C = y.shape
    M = N * OH * OW
    scale, shift = bn_scale_shift(s, q, gamma, beta, count=M)
    res2d = None if residual is None else residual.reshape(M, C)
    out2d = bn_apply(y.reshape(M, C), scale, shift, relu=relu,
                     residual=res2d, out_dtype=out_dtype)
    return out2d.reshape(N, OH, OW, C)


def basic_block(x, p, stride):
    out = conv_bn(x, p['conv1'], stride, 1, p['bn1_g'], p['bn1_b'], relu=True)
    if 'ds' in p:
        idn = conv_bn(x, p['ds'], stride, 0, p['ds_g'], p['ds_b'], relu=False)
    else:
        idn = x
    # bn2 + residual add + ReLU fused into the single apply pass in conv_bn.
    # TODO(synk): with a direct-conv kernel, also fold this BN apply into the
    # next conv's A-tile load to remove one more activation round trip.
    return conv_bn(out, p['conv2'], 1, 1, p['bn2_g'], p['bn2_b'],
                   relu=False, residual=idn)


def resnet18_encoder(x_nhwc, params):
    x = conv_bn(x_nhwc, params['conv1'], 2, 3,
                params['bn1_g'], params['bn1_b'], relu=True)
    # TODO(synk): 3x3/stride-2 max-pool kept as XLA reduce_window glue.
    x = jax.lax.reduce_window(x, jnp.asarray(-jnp.inf, dtype=x.dtype),
                              jax.lax.max, (1, 3, 3, 1), (1, 2, 2, 1),
                              ((0, 0), (1, 1), (1, 1), (0, 0)))
    for stage, stride in zip(('layer1', 'layer2', 'layer3', 'layer4'),
                             (1, 2, 2, 2)):
        blocks = params[stage]
        x = basic_block(x, blocks[0], stride)
        x = basic_block(x, blocks[1], 1)
    # adaptive avg-pool to 1x1 + flatten -> (N, 512), f32
    h = jnp.mean(x.astype(jnp.float32), axis=(1, 2))
    return h


def projection_head(h, params):
    nb = h.shape[0]
    z, s, q = pallas_matmul_stats(h, params['fc1_w'])              # Linear(512,512,bias=False)
    scale, shift = bn_scale_shift(s, q, params['pbn1_g'], params['pbn1_b'], nb)
    z = bn_apply(z, scale, shift, relu=True)                       # BN1d(512) + ReLU
    z, s, q = pallas_matmul_stats(z, params['fc2_w'])              # Linear(512,128,bias=False)
    pd = params['fc2_w'].shape[1]
    scale, shift = bn_scale_shift(s, q, jnp.ones((pd,), jnp.float32),
                                  jnp.zeros((pd,), jnp.float32), nb)
    return bn_apply(z, scale, shift, relu=False, out_dtype=jnp.float32)  # BN1d(128, affine=False)


def simclr_forward(x_nchw, params):
    x_nhwc = jnp.transpose(x_nchw, (0, 2, 3, 1))
    h = resnet18_encoder(x_nhwc, params)
    z = projection_head(h, params)
    return h, z


# --------------------------------------------------------------------------
# Parameter init (shapes match torchvision resnet18 + projection head) and
# one-time preparation (weight transpose + bf16 cast + stem K pad, off the
# hot path).
# --------------------------------------------------------------------------
def init_params(key, input_channels=3, projection_dim=128):
    keys = iter(jax.random.split(key, 64))

    def conv_w(o, i, k):
        std = (2.0 / (i * k * k)) ** 0.5
        return jax.random.normal(next(keys), (o, i, k, k), jnp.float32) * std

    def bn(c):
        return jnp.ones((c,), jnp.float32), jnp.zeros((c,), jnp.float32)

    params = {}
    params['conv1_w'] = conv_w(64, input_channels, 7)
    params['bn1_g'], params['bn1_b'] = bn(64)
    stage_chans = [('layer1', 64, 64), ('layer2', 64, 128),
                   ('layer3', 128, 256), ('layer4', 256, 512)]
    for idx, (name, cin, cout) in enumerate(stage_chans):
        blocks = []
        for b in range(2):
            bp = {}
            in_c = cin if b == 0 else cout
            bp['conv1_w'] = conv_w(cout, in_c, 3)
            bp['bn1_g'], bp['bn1_b'] = bn(cout)
            bp['conv2_w'] = conv_w(cout, cout, 3)
            bp['bn2_g'], bp['bn2_b'] = bn(cout)
            if b == 0 and idx > 0:  # downsample (1x1 conv stride 2 + BN), layers 2-4
                bp['ds_w'] = conv_w(cout, cin, 1)
                bp['ds_g'], bp['ds_b'] = bn(cout)
            blocks.append(bp)
        params[name] = blocks
    # projection head: Linear weights stored as (in, out) so y = x @ W
    params['fc1_w'] = jax.random.normal(next(keys), (512, 512), jnp.float32) / (512.0 ** 0.5)
    params['pbn1_g'], params['pbn1_b'] = bn(512)
    params['fc2_w'] = jax.random.normal(next(keys), (512, projection_dim), jnp.float32) / (512.0 ** 0.5)
    return params


def prepare_params(params):
    """One-time: (O,Cin,KH,KW) -> (K, O) bf16 matmul weights (stem K=147 padded
    to 256 for a lane-dense MXU feed), bf16 fc weights."""
    def prep_conv(w_oihw):
        O, Ci, KH, KW = w_oihw.shape
        K = KH * KW * Ci
        w_mat = jnp.transpose(w_oihw, (2, 3, 1, 0)).reshape(K, O)
        if KH * KW > 1 and K < 512 and K % 128 != 0:   # stem: 147 -> 256
            w_mat = jnp.pad(w_mat, ((0, _round_up(K, 128) - K), (0, 0)))
        return {'w': w_mat.astype(jnp.bfloat16), 'kh': KH, 'kw': KW}

    fp = {'conv1': prep_conv(params['conv1_w']),
          'bn1_g': params['bn1_g'], 'bn1_b': params['bn1_b']}
    for name in ('layer1', 'layer2', 'layer3', 'layer4'):
        blocks = []
        for bp in params[name]:
            nb = {'conv1': prep_conv(bp['conv1_w']),
                  'bn1_g': bp['bn1_g'], 'bn1_b': bp['bn1_b'],
                  'conv2': prep_conv(bp['conv2_w']),
                  'bn2_g': bp['bn2_g'], 'bn2_b': bp['bn2_b']}
            if 'ds_w' in bp:
                nb['ds'] = prep_conv(bp['ds_w'])
                nb['ds_g'], nb['ds_b'] = bp['ds_g'], bp['ds_b']
            blocks.append(nb)
        fp[name] = blocks
    fp['fc1_w'] = params['fc1_w'].astype(jnp.bfloat16)
    fp['pbn1_g'], fp['pbn1_b'] = params['pbn1_g'], params['pbn1_b']
    fp['fc2_w'] = params['fc2_w'].astype(jnp.bfloat16)
    return fp


if __name__ == "__main__":
    key = jax.random.PRNGKey(0)
    pkey, xkey = jax.random.split(key)
    params = prepare_params(init_params(pkey, input_channels=3, projection_dim=128))

    # PyTorch-convention NCHW input (small shapes: batch=2, channels=3, spatial=16)
    x = jax.random.normal(xkey, (2, 3, 16, 16), jnp.float32)

    h, z = simclr_forward(x, params)
    jax.block_until_ready((h, z))
    assert h.shape == (2, 512), h.shape
    assert z.shape == (2, 128), z.shape
    assert bool(jnp.all(jnp.isfinite(h))) and bool(jnp.all(jnp.isfinite(z)))
    print("KERNEL_OK")
</pallas_src>

<mosaic_0001>
module attributes {stable_mosaic.version = 11 : i64} {
  func.func @_mm_stats_kernel(%arg0: i32, %arg1: i32, %arg2: i32, %arg3: memref<128x256xbf16, #tpu.memory_space<vmem>>, %arg4: memref<256x64xbf16, #tpu.memory_space<vmem>>, %arg5: memref<128x64xbf16, #tpu.memory_space<vmem>>, %arg6: memref<1x64xf32, #tpu.memory_space<vmem>>, %arg7: memref<1x64xf32, #tpu.memory_space<vmem>>, %arg8: memref<128x64xf32, #tpu.memory_space<vmem>>) attributes {dimension_semantics = [#tpu.dimension_semantics<parallel>, #tpu.dimension_semantics<arbitrary>, #tpu.dimension_semantics<arbitrary>], iteration_bounds = array<i64: 1, 1, 1>, scalar_prefetch = 0 : i64, scratch_operands = 1 : i64, tpu.core_type = #tpu.core_type<tc>, window_params = [{transform_indices = @transform_0, window_bounds = array<i64: 128, 256>}, {transform_indices = @transform_1, window_bounds = array<i64: 256, 64>}, {transform_indices = @transform_2, window_bounds = array<i64: 128, 64>}, {transform_indices = @transform_3, window_bounds = array<i64: 1, 64>}, {transform_indices = @transform_4, window_bounds = array<i64: 1, 64>}]} {
    %c0_i32 = arith.constant 0 : i32
    %0 = arith.cmpi eq, %arg2, %c0_i32 : i32
    %1 = arith.extui %0 : i1 to i32
    %c0_i32_0 = arith.constant 0 : i32
    %2 = arith.cmpi ne, %1, %c0_i32_0 : i32
    scf.if %2 {
      %cst_13 = arith.constant 0.000000e+00 : f32
      %17 = vector.broadcast %cst_13 : f32 to vector<128x64xf32>
      %c0_14 = arith.constant 0 : index
      %c0_15 = arith.constant 0 : index
      %18 = vector.load %arg8[%c0_14, %c0_15] : memref<128x64xf32, #tpu.memory_space<vmem>>, vector<128x64xf32>
      tpu.vector_store %arg8[%c0_14, %c0_15], %17 {strides = array<i32>} : memref<128x64xf32, #tpu.memory_space<vmem>>, vector<128x64xf32>,
    } else {
    }
    %c0_i32_1 = arith.constant 0 : i32
    %3 = arith.cmpi eq, %arg1, %c0_i32_1 : i32
    %c0_i32_2 = arith.constant 0 : i32
    %4 = arith.cmpi eq, %arg2, %c0_i32_2 : i32
    %5 = arith.andi %3, %4 : i1
    %6 = arith.extui %5 : i1 to i32
    %c0_i32_3 = arith.constant 0 : i32
    %7 = arith.cmpi ne, %6, %c0_i32_3 : i32
    scf.if %7 {
      %cst_13 = arith.constant 0.000000e+00 : f32
      %17 = vector.broadcast %cst_13 : f32 to vector<1x64xf32>
      %c0_14 = arith.constant 0 : index
      %c0_15 = arith.constant 0 : index
      %18 = vector.load %arg6[%c0_14, %c0_15] : memref<1x64xf32, #tpu.memory_space<vmem>>, vector<1x64xf32>
      tpu.vector_store %arg6[%c0_14, %c0_15], %17 {strides = array<i32>} : memref<1x64xf32, #tpu.memory_space<vmem>>, vector<1x64xf32>,
      %cst_16 = arith.constant 0.000000e+00 : f32
      %19 = vector.broadcast %cst_16 : f32 to vector<1x64xf32>
      %c0_17 = arith.constant 0 : index
      %c0_18 = arith.constant 0 : index
      %20 = vector.load %arg7[%c0_17, %c0_18] : memref<1x64xf32, #tpu.memory_space<vmem>>, vector<1x64xf32>
      tpu.vector_store %arg7[%c0_17, %c0_18], %19 {strides = array<i32>} : memref<1x64xf32, #tpu.memory_space<vmem>>, vector<1x64xf32>,
    } else {
    }
    %c0 = arith.constant 0 : index
    %c0_4 = arith.constant 0 : index
    %8 = vector.load %arg8[%c0, %c0_4] : memref<128x64xf32, #tpu.memory_space<vmem>>, vector<128x64xf32>
    %c0_5 = arith.constant 0 : index
    %c0_6 = arith.constant 0 : index
    %9 = vector.load %arg3[%c0_5, %c0_6] : memref<128x256xbf16, #tpu.memory_space<vmem>>, vector<128x256xbf16>
    %c0_7 = arith.constant 0 : index
    %c0_8 = arith.constant 0 : index
    %10 = vector.load %arg4[%c0_7, %c0_8] : memref<256x64xbf16, #tpu.memory_space<vmem>>, vector<256x64xbf16>
    %cst = arith.constant dense<0.000000e+00> : vector<128x64xf32>
    %11 = tpu.matmul %9, %10, %cst {dimension_numbers = #tpu.dot_dimension_numbers<[1], [0], [0], [1], [0, 0, 1, 1], [], []>} : vector<128x256xbf16>, vector<256x64xbf16>, vector<128x64xf32> -> vector<128x64xf32>
    %12 = arith.addf %8, %11 : vector<128x64xf32>
    %c0_9 = arith.constant 0 : index
    %c0_10 = arith.constant 0 : index
    %13 = vector.load %arg8[%c0_9, %c0_10] : memref<128x64xf32, #tpu.memory_space<vmem>>, vector<128x64xf32>
    tpu.vector_store %arg8[%c0_9, %c0_10], %12 {strides = array<i32>} : memref<128x64xf32, #tpu.memory_space<vmem>>, vector<128x64xf32>,
    %c0_i32_11 = arith.constant 0 : i32
    %14 = arith.cmpi eq, %arg2, %c0_i32_11 : i32
    %15 = arith.extui %14 : i1 to i32
    %c0_i32_12 = arith.constant 0 : i32
    %16 = arith.cmpi ne, %15, %c0_i32_12 : i32
    scf.if %16 {
      %c0_13 = arith.constant 0 : index
      %c0_14 = arith.constant 0 : index
      %17 = vector.load %arg8[%c0_13, %c0_14] : memref<128x64xf32, #tpu.memory_space<vmem>>, vector<128x64xf32>
      %18 = arith.truncf %17 : vector<128x64xf32> to vector<128x64xbf16>
      %c0_15 = arith.constant 0 : index
      %c0_16 = arith.constant 0 : index
      %19 = vector.load %arg5[%c0_15, %c0_16] : memref<128x64xbf16, #tpu.memory_space<vmem>>, vector<128x64xbf16>
      tpu.vector_store %arg5[%c0_15, %c0_16], %18 {strides = array<i32>} : memref<128x64xbf16, #tpu.memory_space<vmem>>, vector<128x64xbf16>,
      %c0_17 = arith.constant 0 : index
      %c0_18 = arith.constant 0 : index
      %20 = vector.load %arg6[%c0_17, %c0_18] : memref<1x64xf32, #tpu.memory_space<vmem>>, vector<1x64xf32>
      %cst_19 = arith.constant dense<0.000000e+00> : vector<64xf32>
      %21 = vector.multi_reduction <add>, %17, %cst_19 [0] : vector<128x64xf32> to vector<64xf32>
      %22 = vector.shape_cast %21 : vector<64xf32> to vector<1x64xf32>
      %23 = arith.addf %20, %22 : vector<1x64xf32>
      %c0_20 = arith.constant 0 : index
      %c0_21 = arith.constant 0 : index
      %24 = vector.load %arg6[%c0_20, %c0_21] : memref<1x64xf32, #tpu.memory_space<vmem>>, vector<1x64xf32>
      tpu.vector_store %arg6[%c0_20, %c0_21], %23 {strides = array<i32>} : memref<1x64xf32, #tpu.memory_space<vmem>>, vector<1x64xf32>,
      %c0_22 = arith.constant 0 : index
      %c0_23 = arith.constant 0 : index
      %25 = vector.load %arg7[%c0_22, %c0_23] : memref<1x64xf32, #tpu.memory_space<vmem>>, vector<1x64xf32>
      %26 = arith.mulf %17, %17 : vector<128x64xf32>
      %cst_24 = arith.constant dense<0.000000e+00> : vector<64xf32>
      %27 = vector.multi_reduction <add>, %26, %cst_24 [0] : vector<128x64xf32> to vector<64xf32>
      %28 = vector.shape_cast %27 : vector<64xf32> to vector<1x64xf32>
      %29 = arith.addf %25, %28 : vector<1x64xf32>
      %c0_25 = arith.constant 0 : index
      %c0_26 = arith.constant 0 : index
      %30 = vector.load %arg7[%c0_25, %c0_26] : memref<1x64xf32, #tpu.memory_space<vmem>>, vector<1x64xf32>
      tpu.vector_store %arg7[%c0_25, %c0_26], %29 {strides = array<i32>} : memref<1x64xf32, #tpu.memory_space<vmem>>, vector<1x64xf32>,
    } else {
    }
    return
  }
  func.func @transform_0(%arg0: i32, %arg1: i32, %arg2: i32) -> (i32, i32) {
    %c0_i32 = arith.constant 0 : i32
    return %arg1, %arg2 : i32, i32
  }
  func.func @transform_1(%arg0: i32, %arg1: i32, %arg2: i32) -> (i32, i32) {
    %c0_i32 = arith.constant 0 : i32
    return %arg2, %arg0 : i32, i32
  }
  func.func @transform_2(%arg0: i32, %arg1: i32, %arg2: i32) -> (i32, i32) {
    %c0_i32 = arith.constant 0 : i32
    return %arg1, %arg0 : i32, i32
  }
  func.func @transform_3(%arg0: i32, %arg1: i32, %arg2: i32) -> (i32, i32) {
    %c0_i32 = arith.constant 0 : i32
    %c0_i32_0 = arith.constant 0 : i32
    return %c0_i32, %arg0 : i32, i32
  }
  func.func @transform_4(%arg0: i32, %arg1: i32, %arg2: i32) -> (i32, i32) {
    %c0_i32 = arith.constant 0 : i32
    %c0_i32_0 = arith.constant 0 : i32
    return %c0_i32, %arg0 : i32, i32
  }
}

</mosaic_0001>

<llo_original>
// kernel: tpu_custom_call.1
$region0: #{tpu_custom_call.1}
  #allocation0 [shape = 'u32[]', space=smem, size = 0x4, offset = 0x4, fixed_abs, tag = 'smem constant byte address 0x4 - core index']
  #allocation1 [shape = 'u32[144,128]{1,0:T(1,128)}', space=vmem, size = 0x12000, scoped, tag = 'internal scratch']
  #allocation2 [shape = 'f32[128,64]{1,0:T(8,128)}', space=vmem, size = 0x10000, scoped, tag = 'scratch operand']
  %s0 = inlined_call_operand.vmem [shape: bf16[128,256], index: 0, kind: input, shape index: {}]
  %s1 = inlined_call_operand.vmem [shape: bf16[256,64], index: 1, kind: input, shape index: {}]
  %s2 = inlined_call_operand.vmem [shape: bf16[128,64], index: 2, kind: output, shape index: {0}]
  %s3 = inlined_call_operand.hbm [shape: f32[1,64], index: 3, kind: output, shape index: {1}]
  %s4 = inlined_call_operand.hbm [shape: f32[1,64], index: 4, kind: output, shape index: {2}]
  %5 = xla_tuple %s2, %s3, %s4
  %s6 = sld [smem:[#allocation0]]
  $region46: #{tpu_custom_call.1} parent=0
    _
  %s8 = ssub.s32 1, %s6
  %s9 = scalar_select 0, %s8, %s6
  $region1: #{tpu_custom_call.1} parent=0
    #allocation3 [shape = 'u8[512]{0}', space=vmem, size = 0x400, scoped, tag = 'output window, operand 1, single buffered']
    #allocation4 [shape = 's32[1]{0}', space=sflag, size = 0x4, scoped, tag = 'scoped memory for tpu_custom_call.1']
    #allocation5 [shape = 'u8[512]{0}', space=vmem, size = 0x400, scoped, tag = 'output window, operand 2, single buffered']
    #allocation6 [shape = 's32[1]{0}', space=sflag, size = 0x4, scoped, tag = 'scoped memory for tpu_custom_call.1']
    %10 = vsyncpa [#allocation4], 0
    %11 = vsyncpa [#allocation6], 0
    // Predicated region
    $region2: #{tpu_custom_call.1} parent=1 // pred_check
      _
    $region3: #{tpu_custom_call.1} parent=1 // pred_check_branch
      %13 = sbr.rel (0) target = $region5
    $region4: #{tpu_custom_call.1} parent=1 // pred_region
      _
    $region5: #{tpu_custom_call.1} parent=1 // pred_fallthru
      _
    // Predicated region
    $region6: #{tpu_custom_call.1} parent=1 // pred_check
      _
    $region7: #{tpu_custom_call.1} parent=1 // pred_check_branch
      %15 = sbr.rel (0) target = $region9
    $region8: #{tpu_custom_call.1} parent=1 // pred_region
      _
    $region9: #{tpu_custom_call.1} parent=1 // pred_fallthru
      _
    %p17 = scmp.eq.s32.totalorder 0, 0
    // Predicated region
    $region10: #{tpu_custom_call.1} parent=1 // pred_check
      %p18 = pneg %p17
    $region11: #{tpu_custom_call.1} parent=1 // pred_check_branch
      %20 = sbr.rel (%p18) target = $region13
    $region12: #{tpu_custom_call.1} parent=1 // pred_region
      %vm21 = vcmask 523264
      %22 = vst.msk [vmem:[#allocation2] sm:$0xff] %vm21, 0.0
      %23 = vst.msk [vmem:[#allocation2 + $0x8] sm:$0xff] %vm21, 0.0
      %24 = vst.msk [vmem:[#allocation2 + $0x10] sm:$0xff] %vm21, 0.0
      %25 = vst.msk [vmem:[#allocation2 + $0x18] sm:$0xff] %vm21, 0.0
      %26 = vst.msk [vmem:[#allocation2 + $0x20] sm:$0xff] %vm21, 0.0
      %27 = vst.msk [vmem:[#allocation2 + $0x28] sm:$0xff] %vm21, 0.0
      %28 = vst.msk [vmem:[#allocation2 + $0x30] sm:$0xff] %vm21, 0.0
      %29 = vst.msk [vmem:[#allocation2 + $0x38] sm:$0xff] %vm21, 0.0
      %30 = vst.msk [vmem:[#allocation2 + $0x40] sm:$0xff] %vm21, 0.0
      %31 = vst.msk [vmem:[#allocation2 + $0x48] sm:$0xff] %vm21, 0.0
      %32 = vst.msk [vmem:[#allocation2 + $0x50] sm:$0xff] %vm21, 0.0
      %33 = vst.msk [vmem:[#allocation2 + $0x58] sm:$0xff] %vm21, 0.0
      %34 = vst.msk [vmem:[#allocation2 + $0x60] sm:$0xff] %vm21, 0.0
      %35 = vst.msk [vmem:[#allocation2 + $0x68] sm:$0xff] %vm21, 0.0
      %36 = vst.msk [vmem:[#allocation2 + $0x70] sm:$0xff] %vm21, 0.0
      %37 = vst.msk [vmem:[#allocation2 + $0x78] sm:$0xff] %vm21, 0.0
    $region13: #{tpu_custom_call.1} parent=1 // pred_fallthru
      _
    %p38 = scmp.eq.s32.totalorder 0, 0
    %p39 = pnand %p38, %p17
    %p40 = pneg %p39
    // Predicated region
    $region14: #{tpu_custom_call.1} parent=1 // pred_check
      _
    $region15: #{tpu_custom_call.1} parent=1 // pred_check_branch
      %42 = sbr.rel (%p39) target = $region17
    $region16: #{tpu_custom_call.1} parent=1 // pred_region
      %vm43 = vcmask 516096
      %44 = vst.msk [vmem:[#allocation3] sm:$0x1] %vm43, 0.0
      %45 = vst.msk [vmem:[#allocation5] sm:$0x1] %vm43, 0.0
    $region17: #{tpu_custom_call.1} parent=1 // pred_fallthru
      _
    %v46 = vld [vmem:[#allocation2] sm:$0xff]
    %v47 = vld [vmem:[#allocation2 + $0x8] sm:$0xff]
    %v48 = vld [vmem:[#allocation2 + $0x10] sm:$0xff]
    %v49 = vld [vmem:[#allocation2 + $0x18] sm:$0xff]
    %v50 = vld [vmem:[#allocation2 + $0x20] sm:$0xff]
    %v51 = vld [vmem:[#allocation2 + $0x28] sm:$0xff]
    %v52 = vld [vmem:[#allocation2 + $0x30] sm:$0xff]
    %v53 = vld [vmem:[#allocation2 + $0x38] sm:$0xff]
    %v54 = vld [vmem:[#allocation2 + $0x40] sm:$0xff]
    %v55 = vld [vmem:[#allocation2 + $0x48] sm:$0xff]
    %v56 = vld [vmem:[#allocation2 + $0x50] sm:$0xff]
    %v57 = vld [vmem:[#allocation2 + $0x58] sm:$0xff]
    %v58 = vld [vmem:[#allocation2 + $0x60] sm:$0xff]
    %v59 = vld [vmem:[#allocation2 + $0x68] sm:$0xff]
    %v60 = vld [vmem:[#allocation2 + $0x70] sm:$0xff]
    %v61 = vld [vmem:[#allocation2 + $0x78] sm:$0xff]
    %v62 = vld [vmem:[%s0] sm:$0xff]
    %v63 = vld [vmem:[%s0 + $0x8] sm:$0xff]
    %v64 = vld [vmem:[%s0 + $0x10] sm:$0xff]
    %v65 = vld [vmem:[%s0 + $0x18] sm:$0xff]
    %v66 = vld [vmem:[%s0 + $0x20] sm:$0xff]
    %v67 = vld [vmem:[%s0 + $0x28] sm:$0xff]
    %v68 = vld [vmem:[%s0 + $0x30] sm:$0xff]
    %v69 = vld [vmem:[%s0 + $0x38] sm:$0xff]
    %v70 = vld [vmem:[%s0 + $0x40] sm:$0xff]
    %v71 = vld [vmem:[%s0 + $0x48] sm:$0xff]
    %v72 = vld [vmem:[%s0 + $0x50] sm:$0xff]
    %v73 = vld [vmem:[%s0 + $0x58] sm:$0xff]
    %v74 = vld [vmem:[%s0 + $0x60] sm:$0xff]
    %v75 = vld [vmem:[%s0 + $0x68] sm:$0xff]
    %v76 = vld [vmem:[%s0 + $0x70] sm:$0xff]
    %v77 = vld [vmem:[%s0 + $0x78] sm:$0xff]
    %v78 = vld [vmem:[%s1] sm:$0xf]
    %v79 = vld [vmem:[%s1 + $0x4] sm:$0xf]
    %v80 = vld [vmem:[%s1 + $0x8] sm:$0xf]
    %v81 = vld [vmem:[%s1 + $0xc] sm:$0xf]
    %v82 = vld [vmem:[%s1 + $0x10] sm:$0xf]
    %v83 = vld [vmem:[%s1 + $0x14] sm:$0xf]
    %v84 = vld [vmem:[%s1 + $0x18] sm:$0xf]
    %v85 = vld [vmem:[%s1 + $0x1c] sm:$0xf]
    %v86 = vld [vmem:[%s1 + $0x20] sm:$0xf]
    %v87 = vld [vmem:[%s1 + $0x24] sm:$0xf]
    %v88 = vld [vmem:[%s1 + $0x28] sm:$0xf]
    %v89 = vld [vmem:[%s1 + $0x2c] sm:$0xf]
    %v90 = vld [vmem:[%s1 + $0x30] sm:$0xf]
    %v91 = vld [vmem:[%s1 + $0x34] sm:$0xf]
    %v92 = vld [vmem:[%s1 + $0x38] sm:$0xf]
    %v93 = vld [vmem:[%s1 + $0x3c] sm:$0xf]
    %v94 = vld [vmem:[%s1 + $0x40] sm:$0xf]
    %v95 = vld [vmem:[%s1 + $0x44] sm:$0xf]
    %v96 = vld [vmem:[%s1 + $0x48] sm:$0xf]
    %v97 = vld [vmem:[%s1 + $0x4c] sm:$0xf]
    %v98 = vld [vmem:[%s1 + $0x50] sm:$0xf]
    %v99 = vld [vmem:[%s1 + $0x54] sm:$0xf]
    %v100 = vld [vmem:[%s1 + $0x58] sm:$0xf]
    %v101 = vld [vmem:[%s1 + $0x5c] sm:$0xf]
    %v102 = vld [vmem:[%s1 + $0x60] sm:$0xf]
    %v103 = vld [vmem:[%s1 + $0x64] sm:$0xf]
    %v104 = vld [vmem:[%s1 + $0x68] sm:$0xf]
    %v105 = vld [vmem:[%s1 + $0x6c] sm:$0xf]
    %v106 = vld [vmem:[%s1 + $0x70] sm:$0xf]
    %v107 = vld [vmem:[%s1 + $0x74] sm:$0xf]
    %v108 = vld [vmem:[%s1 + $0x78] sm:$0xf]
    %v109 = vld [vmem:[%s1 + $0x7c] sm:$0xf]
    %v126 = vunpack.c.l.b16 %v62
    %v127 = vunpack.c.h.b16 %v62
    %v128 = vunpack.c.l.b16 %v63
    %v129 = vunpack.c.h.b16 %v63
    %v130 = vunpack.c.l.b16 %v64
    %v131 = vunpack.c.h.b16 %v64
    %v132 = vunpack.c.l.b16 %v65
    %v133 = vunpack.c.h.b16 %v65
    %v134 = vunpack.c.l.b16 %v66
    %v135 = vunpack.c.h.b16 %v66
    %v136 = vunpack.c.l.b16 %v67
    %v137 = vunpack.c.h.b16 %v67
    %v138 = vunpack.c.l.b16 %v68
    %v139 = vunpack.c.h.b16 %v68
    %v140 = vunpack.c.l.b16 %v69
    %v141 = vunpack.c.h.b16 %v69
    %v142 = vunpack.c.l.b16 %v70
    %v143 = vunpack.c.h.b16 %v70
    %v144 = vunpack.c.l.b16 %v71
    %v145 = vunpack.c.h.b16 %v71
    %v146 = vunpack.c.l.b16 %v72
    %v147 = vunpack.c.h.b16 %v72
    %v148 = vunpack.c.l.b16 %v73
    %v149 = vunpack.c.h.b16 %v73
    %v150 = vunpack.c.l.b16 %v74
    %v151 = vunpack.c.h.b16 %v74
    %v152 = vunpack.c.l.b16 %v75
    %v153 = vunpack.c.h.b16 %v75
    %v154 = vunpack.c.l.b16 %v76
    %v155 = vunpack.c.h.b16 %v76
    %v156 = vunpack.c.l.b16 %v77
    %v157 = vunpack.c.h.b16 %v77
    %v158 = vpack.c.b16 %v128, %v126
    %v159 = vpack.c.b16 %v129, %v127
    %v160 = vpack.c.b16 %v132, %v130
    %v161 = vpack.c.b16 %v133, %v131
    %v162 = vpack.c.b16 %v136, %v134
    %v163 = vpack.c.b16 %v137, %v135
    %v164 = vpack.c.b16 %v140, %v138
    %v165 = vpack.c.b16 %v141, %v139
    %v166 = vpack.c.b16 %v144, %v142
    %v167 = vpack.c.b16 %v145, %v143
    %v168 = vpack.c.b16 %v148, %v146
    %v169 = vpack.c.b16 %v149, %v147
    %v170 = vpack.c.b16 %v152, %v150
    %v171 = vpack.c.b16 %v153, %v151
    %v172 = vpack.c.b16 %v156, %v154
    %v173 = vpack.c.b16 %v157, %v155
    %v222 = vunpack.c.l.b16 %v78
    %v223 = vunpack.c.l.b16 %v79
    %v224 = vunpack.c.l.b16 %v80
    %v225 = vunpack.c.l.b16 %v81
    %v226 = vunpack.c.l.b16 %v82
    %v227 = vunpack.c.l.b16 %v83
    %v228 = vunpack.c.l.b16 %v84
    %v229 = vunpack.c.l.b16 %v85
    %v230 = vunpack.c.l.b16 %v86
    %v231 = vunpack.c.l.b16 %v87
    %v232 = vunpack.c.l.b16 %v88
    %v233 = vunpack.c.l.b16 %v89
    %v234 = vunpack.c.l.b16 %v90
    %v235 = vunpack.c.l.b16 %v91
    %v236 = vunpack.c.l.b16 %v92
    %v237 = vunpack.c.l.b16 %v93
    %v238 = vunpack.c.l.b16 %v94
    %v239 = vunpack.c.l.b16 %v95
    %v240 = vunpack.c.l.b16 %v96
    %v241 = vunpack.c.l.b16 %v97
    %v242 = vunpack.c.l.b16 %v98
    %v243 = vunpack.c.l.b16 %v99
    %v244 = vunpack.c.l.b16 %v100
    %v245 = vunpack.c.l.b16 %v101
    %v246 = vunpack.c.l.b16 %v102
    %v247 = vunpack.c.l.b16 %v103
    %v248 = vunpack.c.l.b16 %v104
    %v249 = vunpack.c.l.b16 %v105
    %v250 = vunpack.c.l.b16 %v106
    %v251 = vunpack.c.l.b16 %v107
    %v252 = vunpack.c.l.b16 %v108
    %v253 = vunpack.c.l.b16 %v109
    %v254 = vpack.c.b16 %v223, %v222
    %v255 = vpack.c.b16 %v225, %v224
    %v256 = vpack.c.b16 %v227, %v226
    %v257 = vpack.c.b16 %v229, %v228
    %v258 = vpack.c.b16 %v231, %v230
    %v259 = vpack.c.b16 %v233, %v232
    %v260 = vpack.c.b16 %v235, %v234
    %v261 = vpack.c.b16 %v237, %v236
    %v262 = vpack.c.b16 %v239, %v238
    %v263 = vpack.c.b16 %v241, %v240
    %v264 = vpack.c.b16 %v243, %v242
    %v265 = vpack.c.b16 %v245, %v244
    %v266 = vpack.c.b16 %v247, %v246
    %v267 = vpack.c.b16 %v249, %v248
    %v268 = vpack.c.b16 %v251, %v250
    %v269 = vpack.c.b16 %v253, %v252
    %286 = vmatprep.subr.bf16.mxu0 0
    %287 = vmatpush1.bf16.msra.mxu0 %v261
    %288 = vmatprep.subr.bf16.mxu0 0
    %289 = vmatpush1.bf16.msra.mxu0 %v260
    %290 = vmatprep.subr.bf16.mxu0 0
    %291 = vmatpush1.bf16.msra.mxu0 %v259
    %292 = vmatprep.subr.bf16.mxu0 0
    %293 = vmatpush1.bf16.msra.mxu0 %v258
    %294 = vmatprep.subr.bf16.mxu0 0
    %295 = vmatpush1.bf16.msra.mxu0 %v257
    %296 = vmatprep.subr.bf16.mxu0 0
    %297 = vmatpush1.bf16.msra.mxu0 %v256
    %298 = vmatprep.subr.bf16.mxu0 0
    %299 = vmatpush1.bf16.msra.mxu0 %v255
    %300 = vmatprep.subr.bf16.mxu0 0
    %301 = vmatpush1.bf16.msra.mxu0 %v254
    %302 = vmatprep.subr.bf16.mxu0 0
    %303 = vmatpush2.bf16.msra.mxu0 %v269
    %304 = vmatprep.subr.bf16.mxu0 0
    %305 = vmatpush2.bf16.msra.mxu0 %v268
    %306 = vmatprep.subr.bf16.mxu0 0
    %307 = vmatpush2.bf16.msra.mxu0 %v267
    %308 = vmatprep.subr.bf16.mxu0 0
    %309 = vmatpush2.bf16.msra.mxu0 %v266
    %310 = vmatprep.subr.bf16.mxu0 0
    %311 = vmatpush2.bf16.msra.mxu0 %v265
    %312 = vmatprep.subr.bf16.mxu0 0
    %313 = vmatpush2.bf16.msra.mxu0 %v264
    %314 = vmatprep.subr.bf16.mxu0 0
    %315 = vmatpush2.bf16.msra.mxu0 %v263
    %316 = vmatprep.subr.bf16.mxu0 0
    %317 = vmatpush2.bf16.msra.mxu0 %v262
    %318 = vmatprep.mubr.bf16.mxu0 %v159
    %319 = vmatmul.mubr.bf16.gmra.mxu0 %v158
    %v320 = vpop.f32.mrf.mxu0
    %v321 = vadd.f32 0.0, %v320
    %v322 = vpop.f32.mrf.mxu0
    %v323 = vpop.f32.mrf.mxu0
    %v324 = vadd.f32 0.0, %v323
    %v325 = vpop.f32.mrf.mxu0
    %326 = vmatprep.mubr.bf16.mxu0 %v161
    %327 = vmatmul.mubr.bf16.gmra.mxu0 %v160
    %v328 = vpop.f32.mrf.mxu0
    %v329 = vadd.f32 0.0, %v328
    %v330 = vpop.f32.mrf.mxu0
    %v331 = vpop.f32.mrf.mxu0
    %v332 = vadd.f32 0.0, %v331
    %v333 = vpop.f32.mrf.mxu0
    %334 = vmatprep.mubr.bf16.mxu0 %v163
    %335 = vmatmul.mubr.bf16.gmra.mxu0 %v162
    %v336 = vpop.f32.mrf.mxu0
    %v337 = vadd.f32 0.0, %v336
    %v338 = vpop.f32.mrf.mxu0
    %v339 = vpop.f32.mrf.mxu0
    %v340 = vadd.f32 0.0, %v339
    %v341 = vpop.f32.mrf.mxu0
    %342 = vmatprep.mubr.bf16.mxu0 %v165
    %343 = vmatmul.mubr.bf16.gmra.mxu0 %v164
    %v344 = vpop.f32.mrf.mxu0
    %v345 = vadd.f32 0.0, %v344
    %v346 = vpop.f32.mrf.mxu0
    %v347 = vpop.f32.mrf.mxu0
    %v348 = vadd.f32 0.0, %v347
    %v349 = vpop.f32.mrf.mxu0
    %350 = vmatprep.mubr.bf16.mxu0 %v167
    %351 = vmatmul.mubr.bf16.gmra.mxu0 %v166
    %v352 = vpop.f32.mrf.mxu0
    %v353 = vadd.f32 0.0, %v352
    %v354 = vpop.f32.mrf.mxu0
    %v355 = vpop.f32.mrf.mxu0
    %v356 = vadd.f32 0.0, %v355
    %v357 = vpop.f32.mrf.mxu0
    %358 = vmatprep.mubr.bf16.mxu0 %v169
    %359 = vmatmul.mubr.bf16.gmra.mxu0 %v168
    %v360 = vpop.f32.mrf.mxu0
    %v361 = vadd.f32 0.0, %v360
    %v362 = vpop.f32.mrf.mxu0
    %v363 = vpop.f32.mrf.mxu0
    %v364 = vadd.f32 0.0, %v363
    %v365 = vpop.f32.mrf.mxu0
    %366 = vmatprep.mubr.bf16.mxu0 %v171
    %367 = vmatmul.mubr.bf16.gmra.mxu0 %v170
    %v368 = vpop.f32.mrf.mxu0
    %v369 = vadd.f32 0.0, %v368
    %v370 = vpop.f32.mrf.mxu0
    %v371 = vpop.f32.mrf.mxu0
    %v372 = vadd.f32 0.0, %v371
    %v373 = vpop.f32.mrf.mxu0
    %374 = vmatprep.mubr.bf16.mxu0 %v173
    %375 = vmatmul.mubr.bf16.gmra.mxu0 %v172
    %v376 = vpop.f32.mrf.mxu0
    %v377 = vadd.f32 0.0, %v376
    %v378 = vpop.f32.mrf.mxu0
    %v379 = vpop.f32.mrf.mxu0
    %v380 = vadd.f32 0.0, %v379
    %v381 = vpop.f32.mrf.mxu0
    %382 = vdwg.mxu0
    %v383 = vadd.f32 %v46, %v321
    %v384 = vadd.f32 %v47, %v324
    %v385 = vadd.f32 %v48, %v329
    %v386 = vadd.f32 %v49, %v332
    %v387 = vadd.f32 %v50, %v337
    %v388 = vadd.f32 %v51, %v340
    %v389 = vadd.f32 %v52, %v345
    %v390 = vadd.f32 %v53, %v348
    %v391 = vadd.f32 %v54, %v353
    %v392 = vadd.f32 %v55, %v356
    %v393 = vadd.f32 %v56, %v361
    %v394 = vadd.f32 %v57, %v364
    %v395 = vadd.f32 %v58, %v369
    %v396 = vadd.f32 %v59, %v372
    %v397 = vadd.f32 %v60, %v377
    %v398 = vadd.f32 %v61, %v380
    %vm399 = vcmask 523264
    %400 = vst.msk [vmem:[#allocation2] sm:$0xff] %vm399, %v383
    %401 = vst.msk [vmem:[#allocation2 + $0x8] sm:$0xff] %vm399, %v384
    %402 = vst.msk [vmem:[#allocation2 + $0x10] sm:$0xff] %vm399, %v385
    %403 = vst.msk [vmem:[#allocation2 + $0x18] sm:$0xff] %vm399, %v386
    %404 = vst.msk [vmem:[#allocation2 + $0x20] sm:$0xff] %vm399, %v387
    %405 = vst.msk [vmem:[#allocation2 + $0x28] sm:$0xff] %vm399, %v388
    %406 = vst.msk [vmem:[#allocation2 + $0x30] sm:$0xff] %vm399, %v389
    %407 = vst.msk [vmem:[#allocation2 + $0x38] sm:$0xff] %vm399, %v390
    %408 = vst.msk [vmem:[#allocation2 + $0x40] sm:$0xff] %vm399, %v391
    %409 = vst.msk [vmem:[#allocation2 + $0x48] sm:$0xff] %vm399, %v392
    %410 = vst.msk [vmem:[#allocation2 + $0x50] sm:$0xff] %vm399, %v393
    %411 = vst.msk [vmem:[#allocation2 + $0x58] sm:$0xff] %vm399, %v394
    %412 = vst.msk [vmem:[#allocation2 + $0x60] sm:$0xff] %vm399, %v395
    %413 = vst.msk [vmem:[#allocation2 + $0x68] sm:$0xff] %vm399, %v396
    %414 = vst.msk [vmem:[#allocation2 + $0x70] sm:$0xff] %vm399, %v397
    %415 = vst.msk [vmem:[#allocation2 + $0x78] sm:$0xff] %vm399, %v398
    // Predicated region
    $region18: #{tpu_custom_call.1} parent=1 // pred_check
      %p416 = pneg %p17
    $region19: #{tpu_custom_call.1} parent=1 // pred_check_branch
      %418 = sbr.rel (%p416) target = $region21
    $region20: #{tpu_custom_call.1} parent=1 // pred_region
      %v419 = vld [vmem:[#allocation2] sm:$0xff]
      %v420 = vld [vmem:[#allocation2 + $0x8] sm:$0xff]
      %v421 = vld [vmem:[#allocation2 + $0x10] sm:$0xff]
      %v422 = vld [vmem:[#allocation2 + $0x18] sm:$0xff]
      %v423 = vld [vmem:[#allocation2 + $0x20] sm:$0xff]
      %v424 = vld [vmem:[#allocation2 + $0x28] sm:$0xff]
      %v425 = vld [vmem:[#allocation2 + $0x30] sm:$0xff]
      %v426 = vld [vmem:[#allocation2 + $0x38] sm:$0xff]
      %v427 = vld [vmem:[#allocation2 + $0x40] sm:$0xff]
      %v428 = vld [vmem:[#allocation2 + $0x48] sm:$0xff]
      %v429 = vld [vmem:[#allocation2 + $0x50] sm:$0xff]
      %v430 = vld [vmem:[#allocation2 + $0x58] sm:$0xff]
      %v431 = vld [vmem:[#allocation2 + $0x60] sm:$0xff]
      %v432 = vld [vmem:[#allocation2 + $0x68] sm:$0xff]
      %v433 = vld [vmem:[#allocation2 + $0x70] sm:$0xff]
      %v434 = vld [vmem:[#allocation2 + $0x78] sm:$0xff]
      %v435 = vpack.c.bf16 %v420, %v419
      %v436 = vpack.c.bf16 %v422, %v421
      %v437 = vpack.c.bf16 %v424, %v423
      %v438 = vpack.c.bf16 %v426, %v425
      %v439 = vpack.c.bf16 %v428, %v427
      %v440 = vpack.c.bf16 %v430, %v429
      %v441 = vpack.c.bf16 %v432, %v431
      %v442 = vpack.c.bf16 %v434, %v433
      %v451 = vunpack.c.l.b16 %v435
      %v452 = vunpack.c.h.b16 %v435
      %v453 = vunpack.c.l.b16 %v436
      %v454 = vunpack.c.h.b16 %v436
      %v455 = vunpack.c.l.b16 %v437
      %v456 = vunpack.c.h.b16 %v437
      %v457 = vunpack.c.l.b16 %v438
      %v458 = vunpack.c.h.b16 %v438
      %v459 = vunpack.c.l.b16 %v439
      %v460 = vunpack.c.h.b16 %v439
      %v461 = vunpack.c.l.b16 %v440
      %v462 = vunpack.c.h.b16 %v440
      %v463 = vunpack.c.l.b16 %v441
      %v464 = vunpack.c.h.b16 %v441
      %v465 = vunpack.c.l.b16 %v442
      %v466 = vunpack.c.h.b16 %v442
      %v467 = vpack.c.b16 %v451, %v451
      %v468 = vpack.c.b16 %v452, %v452
      %v469 = vpack.c.b16 %v453, %v453
      %v470 = vpack.c.b16 %v454, %v454
      %v471 = vpack.c.b16 %v455, %v455
      %v472 = vpack.c.b16 %v456, %v456
      %v473 = vpack.c.b16 %v457, %v457
      %v474 = vpack.c.b16 %v458, %v458
      %v475 = vpack.c.b16 %v459, %v459
      %v476 = vpack.c.b16 %v460, %v460
      %v477 = vpack.c.b16 %v461, %v461
      %v478 = vpack.c.b16 %v462, %v462
      %v479 = vpack.c.b16 %v463, %v463
      %v480 = vpack.c.b16 %v464, %v464
      %v481 = vpack.c.b16 %v465, %v465
      %v482 = vpack.c.b16 %v466, %v466
      %vm499 = vcmask 519168
      %500 = vst.msk [vmem:[%s2] sm:$0xf] %vm499, %v467
      %501 = vst.msk [vmem:[%s2 + $0x4] sm:$0xf] %vm499, %v468
      %502 = vst.msk [vmem:[%s2 + $0x8] sm:$0xf] %vm499, %v469
      %503 = vst.msk [vmem:[%s2 + $0xc] sm:$0xf] %vm499, %v470
      %504 = vst.msk [vmem:[%s2 + $0x10] sm:$0xf] %vm499, %v471
      %505 = vst.msk [vmem:[%s2 + $0x14] sm:$0xf] %vm499, %v472
      %506 = vst.msk [vmem:[%s2 + $0x18] sm:$0xf] %vm499, %v473
      %507 = vst.msk [vmem:[%s2 + $0x1c] sm:$0xf] %vm499, %v474
      %508 = vst.msk [vmem:[%s2 + $0x20] sm:$0xf] %vm499, %v475
      %509 = vst.msk [vmem:[%s2 + $0x24] sm:$0xf] %vm499, %v476
      %510 = vst.msk [vmem:[%s2 + $0x28] sm:$0xf] %vm499, %v477
      %511 = vst.msk [vmem:[%s2 + $0x2c] sm:$0xf] %vm499, %v478
      %512 = vst.msk [vmem:[%s2 + $0x30] sm:$0xf] %vm499, %v479
      %513 = vst.msk [vmem:[%s2 + $0x34] sm:$0xf] %vm499, %v480
      %514 = vst.msk [vmem:[%s2 + $0x38] sm:$0xf] %vm499, %v481
      %515 = vst.msk [vmem:[%s2 + $0x3c] sm:$0xf] %vm499, %v482
      %v516 = vld [vmem:[#allocation3] sm:$0x1]
      %v517 = vsel %vm399, %v419, 0.0
      %v518 = vsel %vm399, %v420, 0.0
      %v519 = vadd.f32 %v517, %v518
      %v520 = vsel %vm399, %v421, 0.0
      %v521 = vadd.f32 %v519, %v520
      %v522 = vsel %vm399, %v422, 0.0
      %v523 = vadd.f32 %v521, %v522
      %v524 = vsel %vm399, %v423, 0.0
      %v525 = vadd.f32 %v523, %v524
      %v526 = vsel %vm399, %v424, 0.0
      %v527 = vadd.f32 %v525, %v526
      %v528 = vsel %vm399, %v425, 0.0
      %v529 = vadd.f32 %v527, %v528
      %v530 = vsel %vm399, %v426, 0.0
      %v531 = vadd.f32 %v529, %v530
      %v532 = vsel %vm399, %v427, 0.0
      %v533 = vadd.f32 %v531, %v532
      %v534 = vsel %vm399, %v428, 0.0
      %v535 = vadd.f32 %v533, %v534
      %v536 = vsel %vm399, %v429, 0.0
      %v537 = vadd.f32 %v535, %v536
      %v538 = vsel %vm399, %v430, 0.0
      %v539 = vadd.f32 %v537, %v538
      %v540 = vsel %vm399, %v431, 0.0
      %v541 = vadd.f32 %v539, %v540
      %v542 = vsel %vm399, %v432, 0.0
      %v543 = vadd.f32 %v541, %v542
      %v544 = vsel %vm399, %v433, 0.0
      %v545 = vadd.f32 %v543, %v544
      %v546 = vsel %vm399, %v434, 0.0
      %v547 = vadd.f32 %v545, %v546
      %v548 = vrot.slane %v547, 4
      %v549 = vadd.f32 %v547, %v548
      %v550 = vrot.slane %v549, 2
      %v551 = vadd.f32 %v549, %v550
      %v552 = vrot.slane %v551, 1
      %v553 = vadd.f32 %v551, %v552
      %v554 = vadd.f32 %v516, %v553
      %vm555 = vcmask 516096
      %556 = vst.msk [vmem:[#allocation3] sm:$0x1] %vm555, %v554
      %v557 = vld [vmem:[#allocation5] sm:$0x1]
      %v558 = vmul.f32 %v419, %v419
      %v559 = vmul.f32 %v420, %v420
      %v560 = vmul.f32 %v421, %v421
      %v561 = vmul.f32 %v422, %v422
      %v562 = vmul.f32 %v423, %v423
      %v563 = vmul.f32 %v424, %v424
      %v564 = vmul.f32 %v425, %v425
      %v565 = vmul.f32 %v426, %v426
      %v566 = vmul.f32 %v427, %v427
      %v567 = vmul.f32 %v428, %v428
      %v568 = vmul.f32 %v429, %v429
      %v569 = vmul.f32 %v430, %v430
      %v570 = vmul.f32 %v431, %v431
      %v571 = vmul.f32 %v432, %v432
      %v572 = vmul.f32 %v433, %v433
      %v573 = vmul.f32 %v434, %v434
      %v574 = vsel %vm399, %v558, 0.0
      %v575 = vsel %vm399, %v559, 0.0
      %v576 = vadd.f32 %v574, %v575
      %v577 = vsel %vm399, %v560, 0.0
      %v578 = vadd.f32 %v576, %v577
      %v579 = vsel %vm399, %v561, 0.0
      %v580 = vadd.f32 %v578, %v579
      %v581 = vsel %vm399, %v562, 0.0
      %v582 = vadd.f32 %v580, %v581
      %v583 = vsel %vm399, %v563, 0.0
      %v584 = vadd.f32 %v582, %v583
      %v585 = vsel %vm399, %v564, 0.0
      %v586 = vadd.f32 %v584, %v585
      %v587 = vsel %vm399, %v565, 0.0
      %v588 = vadd.f32 %v586, %v587
      %v589 = vsel %vm399, %v566, 0.0
      %v590 = vadd.f32 %v588, %v589
      %v591 = vsel %vm399, %v567, 0.0
      %v592 = vadd.f32 %v590, %v591
      %v593 = vsel %vm399, %v568, 0.0
      %v594 = vadd.f32 %v592, %v593
      %v595 = vsel %vm399, %v569, 0.0
      %v596 = vadd.f32 %v594, %v595
      %v597 = vsel %vm399, %v570, 0.0
      %v598 = vadd.f32 %v596, %v597
      %v599 = vsel %vm399, %v571, 0.0
      %v600 = vadd.f32 %v598, %v599
      %v601 = vsel %vm399, %v572, 0.0
      %v602 = vadd.f32 %v600, %v601
      %v603 = vsel %vm399, %v573, 0.0
      %v604 = vadd.f32 %v602, %v603
      %v605 = vrot.slane %v604, 4
      %v606 = vadd.f32 %v604, %v605
      %v607 = vrot.slane %v606, 2
      %v608 = vadd.f32 %v606, %v607
      %v609 = vrot.slane %v608, 1
      %v610 = vadd.f32 %v608, %v609
      %v611 = vadd.f32 %v557, %v610
      %612 = vst.msk [vmem:[#allocation5] sm:$0x1] %vm555, %v611
    $region21: #{tpu_custom_call.1} parent=1 // pred_fallthru
      _
    // Predicated region
    $region22: #{tpu_custom_call.1} parent=1 // pred_check
      _
    $region23: #{tpu_custom_call.1} parent=1 // pred_check_branch
      %614 = sbr.rel (0) target = $region25
    $region24: #{tpu_custom_call.1} parent=1 // pred_region
      _
    $region25: #{tpu_custom_call.1} parent=1 // pred_fallthru
      _
    // Predicated region
    $region26: #{tpu_custom_call.1} parent=1 // pred_check
      _
    $region27: #{tpu_custom_call.1} parent=1 // pred_check_branch
      %616 = sbr.rel (0) target = $region29
    $region28: #{tpu_custom_call.1} parent=1 // pred_region
      %s618 = ssub.s32 16, 16
      %619 = vsyncadd [#allocation4], %s618
      %s621 = sshll.u32 [#allocation3], 4
      %s622 = int_to_ptr.vmem [resolvable:$true] %s621
      %624 = dma.vmem_to_hbm [thread:$0]  %s622, 16, %s3, [#allocation4]
    $region29: #{tpu_custom_call.1} parent=1 // pred_fallthru
      _
    // Predicated region
    $region30: #{tpu_custom_call.1} parent=1 // pred_check
      _
    $region31: #{tpu_custom_call.1} parent=1 // pred_check_branch
      %626 = sbr.rel (0) target = $region33
    $region32: #{tpu_custom_call.1} parent=1 // pred_region
      %s628 = ssub.s32 16, 16
      %629 = vsyncadd [#allocation6], %s628
      %s631 = sshll.u32 [#allocation5], 4
      %s632 = int_to_ptr.vmem [resolvable:$true] %s631
      %634 = dma.vmem_to_hbm [thread:$0]  %s632, 16, %s4, [#allocation6]
    $region33: #{tpu_custom_call.1} parent=1 // pred_fallthru
      _
    // Predicated region
    $region34: #{tpu_custom_call.1} parent=1 // pred_check
      _
    $region35: #{tpu_custom_call.1} parent=1 // pred_check_branch
      %636 = sbr.rel (0) target = $region37
    $region36: #{tpu_custom_call.1} parent=1 // pred_region
      _
    $region37: #{tpu_custom_call.1} parent=1 // pred_fallthru
      _
    // Predicated region
    $region38: #{tpu_custom_call.1} parent=1 // pred_check
      _
    $region39: #{tpu_custom_call.1} parent=1 // pred_check_branch
      %638 = sbr.rel (0) target = $region41
    $region40: #{tpu_custom_call.1} parent=1 // pred_region
      %639 = dma.done [#allocation4], 16
    $region41: #{tpu_custom_call.1} parent=1 // pred_fallthru
      _
    // Predicated region
    $region42: #{tpu_custom_call.1} parent=1 // pred_check
      _
    $region43: #{tpu_custom_call.1} parent=1 // pred_check_branch
      %641 = sbr.rel (0) target = $region45
    $region44: #{tpu_custom_call.1} parent=1 // pred_region
      %642 = dma.done [#allocation6], 16
    $region45: #{tpu_custom_call.1} parent=1 // pred_fallthru
      _
    %643 = vsyncpa [#allocation4], 1
    %644 = vsyncpa [#allocation6], 1

</llo_original>
